<compile_context>
chip_gen: v6e
topology: v6e:2x2x1
jax: 0.10.0
libtpu: 0.0.40
codegen_flags: <defaults>
</compile_context>

<pallas_src>
import functools

import jax
import jax.numpy as jnp
from jax.experimental import pallas as pl
from jax.experimental.pallas import tpu as pltpu

_SUBLANES = 8
_LANES = 128


def _sublane_multiple(*dtypes):
    """Sublane multiple for partial blocks: f32 -> 8, bf16 -> 16, int8 -> 32."""
    mult = _SUBLANES
    for dt in dtypes:
        itemsize = max(1, dt.itemsize)
        mult = max(mult, (4 // itemsize) * _SUBLANES)
    return mult


def _tile_plan(n, per_row_bytes_each, sublane_mult, block_rows=None):
    """Pick block_rows / grid / vmem_limit from byte counts, not row counts."""
    total_per_row = sum(per_row_bytes_each)
    big_per_row = max(per_row_bytes_each)

    try:
        info = pltpu.get_tpu_info()
        vmem_phys = int(getattr(info, "vmem_capacity_bytes", 64 << 20))
    except Exception:  # off-TPU tracing / older runtimes: assume v7x (64 MiB)
        vmem_phys = 64 << 20

    # Double-buffered working-set budget: ~24 MiB on 64 MiB parts (v7x),
    # up to ~48 MiB on 128 MiB parts (v5e / v6e).
    ws_budget = (24 << 20) if vmem_phys <= (64 << 20) else (48 << 20)
    max_rows_by_vmem = max(sublane_mult, ws_budget // (2 * max(1, total_per_row)))

    if block_rows is None:
        # Aim for >= ~4 MiB per tile of the largest input stream so the
        # ~0.35 us per-grid-step overhead is negligible vs. DMA time.
        target_rows = max(sublane_mult, (4 << 20) // max(1, big_per_row))
        block_rows = min(n, target_rows, max_rows_by_vmem)

    block_rows = min(int(block_rows), n)
    if block_rows < n:
        block_rows = max(sublane_mult, (block_rows // sublane_mult) * sublane_mult)
        if block_rows >= n:
            block_rows = n
    num_tiles = pl.cdiv(n, block_rows)

    # 2 input streams x 2 pipeline buffers x tile, plus headroom.
    vmem_needed = 2 * block_rows * total_per_row + (2 << 20)
    vmem_limit = int(min(max(vmem_needed, 16 << 20), vmem_phys * 3 // 4))
    return block_rows, num_tiles, vmem_limit


def _write_tile_partial(out_ref, per_row):
    """Reduce the (TN,1) per-row column and write it lane-dense to out_ref."""
    tile_sum = jnp.sum(per_row, axis=0, keepdims=True)            # (1, 1)
    out_ref[...] = jnp.broadcast_to(tile_sum.reshape(1, 1, 1), out_ref.shape)


def _make_dense_kernel(n_total, block_rows):
    ragged = (n_total % block_rows) != 0

    def kernel(preds_ref, labels_ref, out_ref):
        i = pl.program_id(0)
        p = preds_ref[...].astype(jnp.float32)    # (TN, C)
        y = labels_ref[...].astype(jnp.float32)   # (TN, C)

        # Numerically stable log-sum-exp along the class (lane) axis.
        m = jnp.max(p, axis=-1, keepdims=True)                    # (TN, 1)
        shifted = p - m                                           # (TN, C)
        lse = jnp.log(jnp.sum(jnp.exp(shifted), axis=-1, keepdims=True))

        # sum(-y * log_softmax) == sum(y)*lse - sum(y*shifted);
        # exact for soft labels, no full (TN,C) log_softmax materialized.
        sum_y = jnp.sum(y, axis=-1, keepdims=True)
        dot_ys = jnp.sum(y * shifted, axis=-1, keepdims=True)
        per_row = sum_y * lse - dot_ys                            # (TN, 1)

        if ragged:
            # Select (not multiply) so NaN/Inf garbage in padded rows of the
            # final tile cannot propagate into the partial sum.
            row = jax.lax.broadcasted_iota(jnp.int32, (block_rows, 1), 0)
            valid = (i * block_rows + row) < n_total
            per_row = jnp.where(valid, per_row, 0.0)

        _write_tile_partial(out_ref, per_row)

    return kernel


def _make_index_kernel(n_total, block_rows, num_classes):
    ragged = (n_total % block_rows) != 0

    def kernel(preds_ref, idx_ref, out_ref):
        i = pl.program_id(0)
        p = preds_ref[...].astype(jnp.float32)    # (TN, C)
        idx = idx_ref[...]                        # (TN, 1) int32

        m = jnp.max(p, axis=-1, keepdims=True)
        shifted = p - m
        lse = jnp.log(jnp.sum(jnp.exp(shifted), axis=-1, keepdims=True))

        # Gather shifted[row, idx[row]] via lane-iota compare + masked sum
        # (no cross-lane dynamic gather needed).
        lane = jax.lax.broadcasted_iota(jnp.int32, (block_rows, num_classes), 1)
        tgt = jnp.sum(jnp.where(lane == idx, shifted, 0.0), axis=-1, keepdims=True)
        per_row = lse - tgt                                       # (TN, 1)

        if ragged:
            row = jax.lax.broadcasted_iota(jnp.int32, (block_rows, 1), 0)
            valid = (i * block_rows + row) < n_total
            per_row = jnp.where(valid, per_row, 0.0)

        _write_tile_partial(out_ref, per_row)

    return kernel


def _launch(kernel, num_tiles, in_specs, inputs, vmem_limit):
    partials = pl.pallas_call(
        kernel,
        out_shape=jax.ShapeDtypeStruct((num_tiles, _SUBLANES, _LANES), jnp.float32),
        grid_spec=pltpu.PrefetchScalarGridSpec(
            num_scalar_prefetch=0,
            grid=(num_tiles,),
            in_specs=in_specs,
            out_specs=pl.BlockSpec((1, _SUBLANES, _LANES), lambda i: (i, 0, 0)),
        ),
        compiler_params=pltpu.CompilerParams(
            dimension_semantics=("parallel",),
            vmem_limit_bytes=vmem_limit,
        ),
    )(*inputs)
    return partials[:, 0, 0]


@functools.partial(jax.jit, static_argnames=("block_rows",))
def cross_entropy_loss_one_hot(preds, labels, *, block_rows=None):
    """preds: (N, C) logits, labels: (N, C) one-hot (or soft) targets.
    Returns a float32 scalar, matching
    torch.mean(torch.sum(-labels * log_softmax(preds, -1), -1))."""
    assert preds.shape == labels.shape and preds.ndim == 2
    n, c = preds.shape

    sub = _sublane_multiple(preds.dtype, labels.dtype)
    per_row_bytes = [c * preds.dtype.itemsize, c * labels.dtype.itemsize]
    block_rows, num_tiles, vmem_limit = _tile_plan(n, per_row_bytes, sub, block_rows)

    kernel = _make_dense_kernel(n, block_rows)
    in_specs = [
        pl.BlockSpec((block_rows, c), lambda i: (i, 0)),
        pl.BlockSpec((block_rows, c), lambda i: (i, 0)),
    ]
    partials = _launch(kernel, num_tiles, in_specs, (preds, labels), vmem_limit)
    return jnp.sum(partials) / jnp.float32(n)


@functools.partial(jax.jit, static_argnames=("block_rows",))
def cross_entropy_loss_class_indices(preds, label_idx, *, block_rows=None):
    """Fast path: labels given as (N,) int32 class indices (strict one-hot).
    Same result as cross_entropy_loss_one_hot(preds, one_hot(label_idx, C)),
    but streams ~half the HBM bytes (no dense (N, C) label tensor)."""
    assert preds.ndim == 2
    n, c = preds.shape
    assert label_idx.shape == (n,)
    idx2d = label_idx.astype(jnp.int32).reshape(n, 1)

    sub = _sublane_multiple(preds.dtype, idx2d.dtype)
    per_row_bytes = [c * preds.dtype.itemsize, idx2d.dtype.itemsize]
    block_rows, num_tiles, vmem_limit = _tile_plan(n, per_row_bytes, sub, block_rows)

    kernel = _make_index_kernel(n, block_rows, c)
    in_specs = [
        pl.BlockSpec((block_rows, c), lambda i: (i, 0)),
        pl.BlockSpec((block_rows, 1), lambda i: (i, 0)),
    ]
    partials = _launch(kernel, num_tiles, in_specs, (preds, idx2d), vmem_limit)
    return jnp.sum(partials) / jnp.float32(n)


if __name__ == "__main__":
    key = jax.random.PRNGKey(0)
    k1, k2, k3, k4, k5 = jax.random.split(key, 5)

    # 1) Small f32 case (single tile).
    N, C = 8, 32
    preds = jax.random.normal(k1, (N, C), dtype=jnp.float32)
    label_idx = jax.random.randint(k2, (N,), 0, C)
    labels = jax.nn.one_hot(label_idx, C, dtype=jnp.float32)
    loss = cross_entropy_loss_one_hot(preds, labels)
    jax.block_until_ready(loss)
    ref = jnp.mean(jnp.sum(-labels * jax.nn.log_softmax(preds, axis=-1), axis=-1))
    assert jnp.allclose(loss, ref, atol=1e-5, rtol=1e-5), (loss, ref)

    # 2) Tiled + ragged last tile (N not a multiple of block_rows).
    N2, C2 = 50, 40
    preds2 = jax.random.normal(k3, (N2, C2), dtype=jnp.float32)
    idx2 = jax.random.randint(k4, (N2,), 0, C2)
    labels2 = jax.nn.one_hot(idx2, C2, dtype=jnp.float32)
    loss2 = cross_entropy_loss_one_hot(preds2, labels2, block_rows=16)
    jax.block_until_ready(loss2)
    ref2 = jnp.mean(jnp.sum(-labels2 * jax.nn.log_softmax(preds2, -1), -1))
    assert jnp.allclose(loss2, ref2, atol=1e-5, rtol=1e-5), (loss2, ref2)

    # 3) Int32 class-index fast path (half the HBM traffic), same data.
    loss3 = cross_entropy_loss_class_indices(preds2, idx2, block_rows=16)
    jax.block_until_ready(loss3)
    assert jnp.allclose(loss3, ref2, atol=1e-5, rtol=1e-5), (loss3, ref2)

    # 4) bf16 logits exercise dtype-aware sublane rounding (24 -> 16 rows).
    N3, C3 = 40, 64
    preds3 = jax.random.normal(k5, (N3, C3), dtype=jnp.float32).astype(jnp.bfloat16)
    idx3 = jax.random.randint(k2, (N3,), 0, C3)
    labels3 = jax.nn.one_hot(idx3, C3, dtype=jnp.float32)
    loss4 = cross_entropy_loss_one_hot(preds3, labels3, block_rows=24)
    jax.block_until_ready(loss4)
    ref4 = jnp.mean(jnp.sum(
        -labels3 * jax.nn.log_softmax(preds3.astype(jnp.float32), -1), -1))
    assert jnp.allclose(loss4, ref4, atol=1e-4, rtol=1e-4), (loss4, ref4)

    print("KERNEL_OK")
</pallas_src>

<mosaic_0001>
module attributes {stable_mosaic.version = 11 : i64} {
  func.func @kernel(%arg0: i32, %arg1: memref<8x32xf32, #tpu.memory_space<vmem>>, %arg2: memref<8x32xf32, #tpu.memory_space<vmem>>, %arg3: memref<1x8x128xf32, #tpu.memory_space<vmem>>) attributes {dimension_semantics = [#tpu.dimension_semantics<parallel>], iteration_bounds = array<i64: 1>, scalar_prefetch = 0 : i64, scratch_operands = 0 : i64, tpu.core_type = #tpu.core_type<tc>, window_params = [{transform_indices = @transform_0, window_bounds = array<i64: 8, 32>}, {transform_indices = @transform_1, window_bounds = array<i64: 8, 32>}, {transform_indices = @transform_2, window_bounds = array<i64: 1, 8, 128>}]} {
    %c0 = arith.constant 0 : index
    %c0_0 = arith.constant 0 : index
    %0 = vector.load %arg1[%c0, %c0_0] : memref<8x32xf32, #tpu.memory_space<vmem>>, vector<8x32xf32>
    %c0_1 = arith.constant 0 : index
    %c0_2 = arith.constant 0 : index
    %1 = vector.load %arg2[%c0_1, %c0_2] : memref<8x32xf32, #tpu.memory_space<vmem>>, vector<8x32xf32>
    %cst = arith.constant dense<0xFF800000> : vector<8xf32>
    %2 = vector.multi_reduction <maximumf>, %0, %cst [1] : vector<8x32xf32> to vector<8xf32>
    %3 = vector.shape_cast %2 : vector<8xf32> to vector<8x1xf32>
    %4 = vector.broadcast %3 : vector<8x1xf32> to vector<8x32xf32>
    %5 = arith.subf %0, %4 : vector<8x32xf32>
    %6 = math.exp %5 : vector<8x32xf32>
    %cst_3 = arith.constant dense<0.000000e+00> : vector<8xf32>
    %7 = vector.multi_reduction <add>, %6, %cst_3 [1] : vector<8x32xf32> to vector<8xf32>
    %8 = vector.shape_cast %7 : vector<8xf32> to vector<8x1xf32>
    %9 = math.log %8 : vector<8x1xf32>
    %cst_4 = arith.constant dense<0.000000e+00> : vector<8xf32>
    %10 = vector.multi_reduction <add>, %1, %cst_4 [1] : vector<8x32xf32> to vector<8xf32>
    %11 = vector.shape_cast %10 : vector<8xf32> to vector<8x1xf32>
    %12 = arith.mulf %1, %5 : vector<8x32xf32>
    %cst_5 = arith.constant dense<0.000000e+00> : vector<8xf32>
    %13 = vector.multi_reduction <add>, %12, %cst_5 [1] : vector<8x32xf32> to vector<8xf32>
    %14 = vector.shape_cast %13 : vector<8xf32> to vector<8x1xf32>
    %15 = arith.mulf %11, %9 : vector<8x1xf32>
    %16 = arith.subf %15, %14 : vector<8x1xf32>
    %cst_6 = arith.constant dense<0.000000e+00> : vector<1xf32>
    %17 = vector.multi_reduction <add>, %16, %cst_6 [0] : vector<8x1xf32> to vector<1xf32>
    %18 = vector.shape_cast %17 : vector<1xf32> to vector<1x1xf32>
    %19 = vector.shape_cast %18 : vector<1x1xf32> to vector<1x1x1xf32>
    %20 = vector.shape_cast %19 : vector<1x1x1xf32> to vector<1x1x1xf32>
    %21 = vector.broadcast %20 : vector<1x1x1xf32> to vector<1x8x128xf32>
    %c0_7 = arith.constant 0 : index
    %c0_8 = arith.constant 0 : index
    %c0_9 = arith.constant 0 : index
    %22 = vector.load %arg3[%c0_7, %c0_8, %c0_9] : memref<1x8x128xf32, #tpu.memory_space<vmem>>, vector<1x8x128xf32>
    tpu.vector_store %arg3[%c0_7, %c0_8, %c0_9], %21 {strides = array<i32>} : memref<1x8x128xf32, #tpu.memory_space<vmem>>, vector<1x8x128xf32>,
    return
  }
  func.func @transform_0(%arg0: i32) -> (i32, i32) {
    %c0_i32 = arith.constant 0 : i32
    %c0_i32_0 = arith.constant 0 : i32
    return %arg0, %c0_i32 : i32, i32
  }
  func.func @transform_1(%arg0: i32) -> (i32, i32) {
    %c0_i32 = arith.constant 0 : i32
    %c0_i32_0 = arith.constant 0 : i32
    return %arg0, %c0_i32 : i32, i32
  }
  func.func @transform_2(%arg0: i32) -> (i32, i32, i32) {
    %c0_i32 = arith.constant 0 : i32
    %c0_i32_0 = arith.constant 0 : i32
    %c0_i32_1 = arith.constant 0 : i32
    return %arg0, %c0_i32, %c0_i32_0 : i32, i32, i32
  }
}

</mosaic_0001>

<llo_original>
// kernel: cross_entropy_loss_one_hot.1
$region0: #{cross_entropy_loss_one_hot.1}
  #allocation0 [shape = 'u32[]', space=smem, size = 0x4, offset = 0x4, fixed_abs, tag = 'smem constant byte address 0x4 - core index']
  #allocation1 [shape = 'u32[144,128]{1,0:T(1,128)}', space=vmem, size = 0x12000, scoped, tag = 'internal scratch']
  %s0 = inlined_call_operand.hbm [shape: f32[8,32], index: 0, kind: input, shape index: {}]
  %s1 = inlined_call_operand.hbm [shape: f32[8,32], index: 1, kind: input, shape index: {}]
  %s2 = inlined_call_operand.vmem [shape: f32[1,8,128], index: 2, kind: output, shape index: {}]
  %s3 = sld [smem:[#allocation0]]
  $region26: #{cross_entropy_loss_one_hot.1} parent=0
    _
  %s5 = ssub.s32 1, %s3
  %s6 = scalar_select 0, %s5, %s3
  $region1: #{cross_entropy_loss_one_hot.1} parent=0
    #allocation2 [shape = 'u8[4096]{0}', space=vmem, size = 0x1000, scoped, tag = 'input window, operand 0, single buffered']
    #allocation3 [shape = 's32[1]{0}', space=sflag, size = 0x4, scoped, tag = 'scoped memory for cross_entropy_loss_one_hot.1']
    #allocation4 [shape = 'u8[4096]{0}', space=vmem, size = 0x1000, scoped, tag = 'input window, operand 1, single buffered']
    #allocation5 [shape = 's32[1]{0}', space=sflag, size = 0x4, scoped, tag = 'scoped memory for cross_entropy_loss_one_hot.1']
    %7 = vsyncpa [#allocation3], 0
    %8 = vsyncpa [#allocation5], 0
    // Predicated region
    $region2: #{cross_entropy_loss_one_hot.1} parent=1 // pred_check
      _
    $region3: #{cross_entropy_loss_one_hot.1} parent=1 // pred_check_branch
      %10 = sbr.rel (0) target = $region5
    $region4: #{cross_entropy_loss_one_hot.1} parent=1 // pred_region
      %s12 = ssub.s32 128, 128
      %13 = vsyncadd [#allocation3], %s12
      %s15 = sshll.u32 [#allocation2], 4
      %s16 = int_to_ptr.vmem [resolvable:$true] %s15
      %18 = dma.hbm_to_vmem [thread:$0]  %s0, 128, %s16, [#allocation3]
    $region5: #{cross_entropy_loss_one_hot.1} parent=1 // pred_fallthru
      _
    // Predicated region
    $region6: #{cross_entropy_loss_one_hot.1} parent=1 // pred_check
      _
    $region7: #{cross_entropy_loss_one_hot.1} parent=1 // pred_check_branch
      %20 = sbr.rel (0) target = $region9
    $region8: #{cross_entropy_loss_one_hot.1} parent=1 // pred_region
      %s22 = ssub.s32 128, 128
      %23 = vsyncadd [#allocation5], %s22
      %s25 = sshll.u32 [#allocation4], 4
      %s26 = int_to_ptr.vmem [resolvable:$true] %s25
      %28 = dma.hbm_to_vmem [thread:$0]  %s1, 128, %s26, [#allocation5]
    $region9: #{cross_entropy_loss_one_hot.1} parent=1 // pred_fallthru
      _
    // Predicated region
    $region10: #{cross_entropy_loss_one_hot.1} parent=1 // pred_check
      _
    $region11: #{cross_entropy_loss_one_hot.1} parent=1 // pred_check_branch
      %30 = sbr.rel (0) target = $region13
    $region12: #{cross_entropy_loss_one_hot.1} parent=1 // pred_region
      %31 = dma.done [#allocation3], 128
    $region13: #{cross_entropy_loss_one_hot.1} parent=1 // pred_fallthru
      _
    // Predicated region
    $region14: #{cross_entropy_loss_one_hot.1} parent=1 // pred_check
      _
    $region15: #{cross_entropy_loss_one_hot.1} parent=1 // pred_check_branch
      %33 = sbr.rel (0) target = $region17
    $region16: #{cross_entropy_loss_one_hot.1} parent=1 // pred_region
      %34 = dma.done [#allocation5], 128
    $region17: #{cross_entropy_loss_one_hot.1} parent=1 // pred_fallthru
      _
    %v35 = vld [vmem:[#allocation2] sm:$0xff]
    %v36 = vld [vmem:[#allocation4] sm:$0xff]
    %vm37 = vcmask 261120
    %v38 = vsel %vm37, %v35, -inf
    %39 = vmax.xlane.f32.xlu0 %v38
    %v40 = vpop.xlane.xlu0 %39
    %v41 = vsub.f32 %v35, %v40
    %v42 = vmul.f32 %v41, 1.442695
    %v43 = vpow.pop %v42
    %v44 = vsel %vm37, %v43, 0.0
    %45 = vadd.xlane.f32.xlu0 %v44
    %v46 = vpop.xlane.xlu0 %45
    %v47 = vlog2.pop %v46
    %v48 = vmul.f32 %v47, 0.6931472
    %v49 = vsel %vm37, %v36, 0.0
    %50 = vadd.xlane.f32.xlu0 %v49
    %v51 = vpop.xlane.xlu0 %50
    %v52 = vmul.f32 %v36, %v41
    %v53 = vsel %vm37, %v52, 0.0
    %54 = vadd.xlane.f32.xlu0 %v53
    %v55 = vpop.xlane.xlu0 %54
    %v56 = vmul.f32 %v51, %v48
    %v57 = vsub.f32 %v56, %v55
    %v58 = vrot.slane %v57, 4
    %v59 = vadd.f32 %v57, %v58
    %v60 = vrot.slane %v59, 2
    %v61 = vadd.f32 %v59, %v60
    %v62 = vrot.slane %v61, 1
    %v63 = vadd.f32 %v61, %v62
    %64 = vst [vmem:[%s2] sm:$0xff] %v63
    // Predicated region
    $region18: #{cross_entropy_loss_one_hot.1} parent=1 // pred_check
      _
    $region19: #{cross_entropy_loss_one_hot.1} parent=1 // pred_check_branch
      %66 = sbr.rel (0) target = $region21
    $region20: #{cross_entropy_loss_one_hot.1} parent=1 // pred_region
      _
    $region21: #{cross_entropy_loss_one_hot.1} parent=1 // pred_fallthru
      _
    // Predicated region
    $region22: #{cross_entropy_loss_one_hot.1} parent=1 // pred_check
      _
    $region23: #{cross_entropy_loss_one_hot.1} parent=1 // pred_check_branch
      %68 = sbr.rel (0) target = $region25
    $region24: #{cross_entropy_loss_one_hot.1} parent=1 // pred_region
      _
    $region25: #{cross_entropy_loss_one_hot.1} parent=1 // pred_fallthru
      _
    %69 = vsyncpa [#allocation3], 1
    %70 = vsyncpa [#allocation5], 1

</llo_original>
